<compile_context>
chip_gen: v7x
topology: tpu7x:2x2x1
jax: 0.10.0
libtpu: 0.0.40
codegen_flags: <defaults>
</compile_context>

<pallas_src>
import functools

import jax
import jax.numpy as jnp
import numpy as np
from jax.experimental import pallas as pl
from jax.experimental.pallas import tpu as pltpu


# ----------------------------------------------------------------------------- table
def _make_encoding(d_model: int, max_len: int = 5000) -> jnp.ndarray:
    """Sinusoidal table, same math as the PyTorch __init__ (odd d_model safe)."""
    position = jnp.arange(max_len, dtype=jnp.float32)[:, None]                  # (max_len, 1)
    div_term = jnp.exp(
        jnp.arange(0, d_model, 2, dtype=jnp.float32) * (-np.log(10000.0) / d_model)
    )                                                                            # (ceil(D/2),)
    angles = position * div_term                                                 # (max_len, ceil(D/2))
    enc = jnp.zeros((max_len, d_model), jnp.float32)
    enc = enc.at[:, 0::2].set(jnp.sin(angles))
    enc = enc.at[:, 1::2].set(jnp.cos(angles[:, : d_model // 2]))                # odd-D safe
    return enc[None, :, :]                                                       # (1, max_len, d_model)


# ----------------------------------------------------------------------------- kernel
def _add_pe_kernel(x_ref, pe_ref, o_ref):
    # Memory-bound elementwise add; PE cast per tile is free VPU filler.
    x = x_ref[...]
    pe = pe_ref[...].astype(x.dtype)
    o_ref[...] = (x + pe).astype(o_ref.dtype)


# ----------------------------------------------------------------------------- tuning
_SMALL_BYTES = 256 * 1024        # below this: one whole-array block, no grid overhead


@functools.lru_cache(maxsize=1)
def _vmem_limit_bytes() -> int:
    """Generation-aware scoped-VMEM limit: ~48 MiB on v7x (64 MiB phys), 64 MiB on v5e/v6e."""
    phys = 64 * 1024 * 1024
    try:
        info = pltpu.get_tpu_info()
        phys = int(getattr(info, "vmem_capacity_bytes", phys)) or phys
    except Exception:
        pass
    return min((phys * 3) // 4, 64 * 1024 * 1024)


def _sublane_pack(itemsize: int) -> int:
    """Full-pack sublane multiple: 8 for f32, 16 for bf16, 32 for int8/fp8."""
    return max(8, 32 // max(1, itemsize))


def _pick_row_tile(n_rows: int, itemsize: int, vmem_limit: int, n_batch: int) -> int:
    """Row count (of a (rows,128) view) per tile. 0 => no clean tiling; use seq path."""
    pack = _sublane_pack(itemsize)
    target_bytes = min(4 << 20, max(256 * 1024, vmem_limit // 8))        # ~4 MiB tiles
    target_rows = max(pack, (target_bytes // (128 * itemsize)) // pack * pack)
    # Keep >= ~8 total grid steps so both v7x TCs get work and double-buffering has depth.
    while target_rows > pack and -(-n_rows // target_rows) * n_batch < 8:
        target_rows = max(pack, ((target_rows // 2) // pack) * pack)
    if n_rows <= target_rows:
        return n_rows                      # full extent (<= ~4 MiB): always legal & VMEM-safe
    for step in (pack, 8):                 # prefer full-pack tiles, then any multiple of 8
        t = min(target_rows, (n_rows // step) * step)
        while t >= step:
            if n_rows % t == 0:
                return t
            t -= step
    return 0                               # no clean divisor: caller falls back (never full R)


def _pick_seq_tile(S: int, D: int, itemsize: int, vmem_limit: int) -> int:
    """Sequence-tile for the unaligned path. 0 => use ragged-last-block grid."""
    pack = _sublane_pack(itemsize)
    target_bytes = min(2 << 20, max(128 * 1024, vmem_limit // 8))
    target_rows = max(pack, (target_bytes // max(1, D * itemsize)) // pack * pack)
    if S <= target_rows and 6 * S * D * itemsize <= vmem_limit:
        return S
    for step in (pack, 8):
        t = min(target_rows, (S // step) * step)
        while t >= step:
            if S % t == 0:
                return t
            t -= step
    if 6 * S * D * itemsize <= vmem_limit:
        return S
    return 0


# ----------------------------------------------------------------------------- forward
def positional_encoding_forward(
    x: jnp.ndarray, encoding: jnp.ndarray, encoding_lanes: jnp.ndarray | None = None
) -> jnp.ndarray:
    """x: (B, S, D); encoding: (1, max_len, D) float32. Returns x + encoding[:, :S]."""
    B, S, D = x.shape
    max_len = encoding.shape[1]
    assert encoding.shape[2] == D and S <= max_len, "sequence longer than PE table"

    itemsize = np.dtype(x.dtype).itemsize
    pe_itemsize = np.dtype(encoding.dtype).itemsize
    N = S * D
    total_bytes = B * N * itemsize
    vmem_limit = _vmem_limit_bytes()

    cost = pl.CostEstimate(
        flops=int(B * N),
        bytes_accessed=int(2 * B * N * itemsize + N * pe_itemsize),
        transcendentals=0,
    )

    # ---- Path 1: tiny problem -> single whole-array block (no grid / per-step overhead).
    if total_bytes <= _SMALL_BYTES:
        pe = encoding[:, :S, :]                                    # tiny; f32, cast in kernel
        return pl.pallas_call(
            _add_pe_kernel,
            out_shape=jax.ShapeDtypeStruct((B, S, D), x.dtype),
            compiler_params=pltpu.CompilerParams(vmem_limit_bytes=vmem_limit),
        )(x, pe)

    # ---- Path 2: lane-dense tiled hot path.
    if N % 128 == 0:
        R = N // 128
        r_tile = _pick_row_tile(R, itemsize, vmem_limit, B)
        if r_tile > 0:
            x3 = x.reshape(B, R, 128)                              # row-major lane view
            if encoding_lanes is not None:
                pe3 = encoding_lanes                               # cached at init: zero per-call traffic
            elif (max_len * D) % 128 == 0:
                pe3 = encoding.reshape(1, (max_len * D) // 128, 128)
            else:
                pe3 = encoding[:, :S, :].reshape(1, R, 128)
            grid = (R // r_tile, B)                                # batch innermost -> PE tile reused
            out3 = pl.pallas_call(
                _add_pe_kernel,
                out_shape=jax.ShapeDtypeStruct((B, R, 128), x.dtype),
                grid_spec=pltpu.PrefetchScalarGridSpec(
                    num_scalar_prefetch=0,
                    grid=grid,
                    in_specs=[
                        pl.BlockSpec((None, r_tile, 128), lambda n, b: (b, n, 0)),
                        pl.BlockSpec((None, r_tile, 128), lambda n, b: (0, n, 0)),
                    ],
                    out_specs=pl.BlockSpec((None, r_tile, 128), lambda n, b: (b, n, 0)),
                ),
                compiler_params=pltpu.CompilerParams(
                    dimension_semantics=("parallel", "parallel"),
                    vmem_limit_bytes=vmem_limit,
                ),
                cost_estimate=cost,
            )(x3, pe3)
            return out3.reshape(B, S, D)

    # ---- Path 3: unaligned / awkward-R fallback, tiled over the sequence dimension.
    s_tile = _pick_seq_tile(S, D, itemsize, vmem_limit)
    if s_tile > 0:
        grid_s = S // s_tile
        pe_in = encoding                                           # full table; blocks stay in [0, S)
    else:
        # Last resort: ragged last block (mult-of-8 tile); slice PE so x/pe share seq extent.
        pack = _sublane_pack(itemsize)
        target_rows = max(pack, ((2 << 20) // max(1, D * itemsize)) // pack * pack)
        s_tile = min(((S // pack) * pack) or pack, target_rows)
        grid_s = pl.cdiv(S, s_tile)
        pe_in = encoding[:, :S, :]

    return pl.pallas_call(
        _add_pe_kernel,
        out_shape=jax.ShapeDtypeStruct((B, S, D), x.dtype),
        grid_spec=pltpu.PrefetchScalarGridSpec(
            num_scalar_prefetch=0,
            grid=(grid_s, B),                                      # batch innermost -> PE tile reused
            in_specs=[
                pl.BlockSpec((1, s_tile, D), lambda s, b: (b, s, 0)),
                pl.BlockSpec((1, s_tile, D), lambda s, b: (0, s, 0)),
            ],
            out_specs=pl.BlockSpec((1, s_tile, D), lambda s, b: (b, s, 0)),
        ),
        compiler_params=pltpu.CompilerParams(
            dimension_semantics=("parallel", "parallel"),
            vmem_limit_bytes=vmem_limit,
        ),
        cost_estimate=cost,
    )(x, pe_in)


# ----------------------------------------------------------------------------- module
class PositionalEncoding:
    """Mirror of the PyTorch module: builds the table once and caches the lane-dense view."""

    def __init__(self, transformer_input_feature_size: int, max_len: int = 5000):
        self.encoding = _make_encoding(transformer_input_feature_size, max_len)  # (1, max_len, D) f32
        if (max_len * transformer_input_feature_size) % 128 == 0:
            self.encoding_lanes = self.encoding.reshape(
                1, (max_len * transformer_input_feature_size) // 128, 128
            )
        else:
            self.encoding_lanes = None

    def __call__(self, x: jnp.ndarray) -> jnp.ndarray:
        return positional_encoding_forward(x, self.encoding, self.encoding_lanes)


# ----------------------------------------------------------------------------- tests
if __name__ == "__main__":
    MAX_LEN = 5000
    key = jax.random.PRNGKey(0)

    # 1) Tiny shape implied by the module (Path 1): batch=2, seq=8, d_model=32.
    B, S, D = 2, 8, 32
    x = jax.random.normal(key, (B, S, D), dtype=jnp.float32)
    mod = PositionalEncoding(D, MAX_LEN)
    out = jax.block_until_ready(mod(x))
    ref = x + mod.encoding[:, :S, :]
    np.testing.assert_allclose(np.asarray(out), np.asarray(ref), rtol=1e-6, atol=1e-6)

    # 2) Lane-dense tiled hot path (Path 2).
    B2, S2, D2 = 2, 2048, 256
    x2 = jax.random.normal(jax.random.fold_in(key, 1), (B2, S2, D2), dtype=jnp.float32)
    mod2 = PositionalEncoding(D2, MAX_LEN)
    out2 = jax.block_until_ready(mod2(x2))
    ref2 = x2 + mod2.encoding[:, :S2, :]
    np.testing.assert_allclose(np.asarray(out2), np.asarray(ref2), rtol=1e-6, atol=1e-6)

    # 3) Non-128-aligned fallback tiled over the sequence dim (Path 3).
    B3, S3, D3 = 2, 520, 68
    x3 = jax.random.normal(jax.random.fold_in(key, 2), (B3, S3, D3), dtype=jnp.float32)
    mod3 = PositionalEncoding(D3, MAX_LEN)
    out3 = jax.block_until_ready(mod3(x3))
    ref3 = x3 + mod3.encoding[:, :S3, :]
    np.testing.assert_allclose(np.asarray(out3), np.asarray(ref3), rtol=1e-6, atol=1e-6)

    print("KERNEL_OK")
</pallas_src>

<mosaic_0001>
module attributes {stable_mosaic.version = 11 : i64} {
  func.func @_add_pe_kernel(%arg0: memref<2x8x32xf32, #tpu.memory_space<vmem>>, %arg1: memref<1x8x32xf32, #tpu.memory_space<vmem>>, %arg2: memref<2x8x32xf32, #tpu.memory_space<vmem>>) attributes {dimension_semantics = [], scalar_prefetch = 0 : i64, scratch_operands = 0 : i64, tpu.core_type = #tpu.core_type<tc>} {
    %c0 = arith.constant 0 : index
    %c0_0 = arith.constant 0 : index
    %c0_1 = arith.constant 0 : index
    %0 = vector.load %arg0[%c0, %c0_0, %c0_1] : memref<2x8x32xf32, #tpu.memory_space<vmem>>, vector<2x8x32xf32>
    %c0_2 = arith.constant 0 : index
    %c0_3 = arith.constant 0 : index
    %c0_4 = arith.constant 0 : index
    %1 = vector.load %arg1[%c0_2, %c0_3, %c0_4] : memref<1x8x32xf32, #tpu.memory_space<vmem>>, vector<1x8x32xf32>
    %2 = vector.broadcast %1 : vector<1x8x32xf32> to vector<2x8x32xf32>
    %3 = arith.addf %0, %2 : vector<2x8x32xf32>
    %c0_5 = arith.constant 0 : index
    %c0_6 = arith.constant 0 : index
    %c0_7 = arith.constant 0 : index
    %4 = vector.load %arg2[%c0_5, %c0_6, %c0_7] : memref<2x8x32xf32, #tpu.memory_space<vmem>>, vector<2x8x32xf32>
    tpu.vector_store %arg2[%c0_5, %c0_6, %c0_7], %3 {strides = array<i32>} : memref<2x8x32xf32, #tpu.memory_space<vmem>>, vector<2x8x32xf32>,
    return
  }
}

</mosaic_0001>

<llo_original>
// kernel: tpu_custom_call.1
$region0: #{tpu_custom_call.1}
  #allocation0 [shape = 'u32[]', space=smem, size = 0x4, offset = 0x4, fixed_abs, tag = 'smem constant byte address 0x4 - core index']
  #allocation1 [shape = 'u32[144,128]{1,0:T(1,128)}', space=vmem, size = 0x12000, scoped, tag = 'internal scratch']
  %s0 = inlined_call_operand.hbm [shape: f32[2,8,32], index: 0, kind: input, shape index: {}]
  %s1 = inlined_call_operand.hbm [shape: f32[1,8,32], index: 1, kind: input, shape index: {}]
  %s2 = inlined_call_operand.hbm [shape: f32[2,8,32], index: 2, kind: output, shape index: {}]
  %s3 = sld [smem:[#allocation0]]
  $region26: #{tpu_custom_call.1} parent=0
    _
  %s5 = ssub.s32 1, %s3
  %s6 = scalar_select 0, %s5, %s3
  $region1: #{tpu_custom_call.1} parent=0
    #allocation2 [shape = 'u8[8192]{0}', space=vmem, size = 0x2000, scoped, tag = 'input window, operand 0, single buffered']
    #allocation3 [shape = 's32[1]{0}', space=sflag, size = 0x4, scoped, tag = 'scoped memory for tpu_custom_call.1']
    #allocation4 [shape = 's32[1]{0}', space=sflag, size = 0x4, scoped, tag = 'scoped memory for tpu_custom_call.1']
    #allocation5 [shape = 'u8[4096]{0}', space=vmem, size = 0x1000, scoped, tag = 'input window, operand 1, single buffered']
    #allocation6 [shape = 's32[1]{0}', space=sflag, size = 0x4, scoped, tag = 'scoped memory for tpu_custom_call.1']
    #allocation7 [shape = 'u8[8192]{0}', space=vmem, size = 0x2000, scoped, tag = 'output window, operand 0, single buffered']
    %7 = vsyncpa [#allocation3], 0
    %8 = vsyncpa [#allocation6], 0
    %9 = vsyncpa [#allocation4], 0
    // Predicated region
    $region2: #{tpu_custom_call.1} parent=1 // pred_check
      _
    $region3: #{tpu_custom_call.1} parent=1 // pred_check_branch
      %11 = sbr.rel (0) target = $region5
    $region4: #{tpu_custom_call.1} parent=1 // pred_region
      %s13 = ssub.s32 256, 256
      %14 = vsyncadd [#allocation3], %s13
      %s15 = sshll.u32 [#allocation2], 4
      %s16 = int_to_ptr.vmem [resolvable:$true] %s15
      %21 = dma.hbm_to_vmem [thread:$0]  %s0, 256, %s16, [#allocation3], 128, 128, 8
    $region5: #{tpu_custom_call.1} parent=1 // pred_fallthru
      _
    // Predicated region
    $region6: #{tpu_custom_call.1} parent=1 // pred_check
      _
    $region7: #{tpu_custom_call.1} parent=1 // pred_check_branch
      %23 = sbr.rel (0) target = $region9
    $region8: #{tpu_custom_call.1} parent=1 // pred_region
      %s25 = ssub.s32 128, 128
      %26 = vsyncadd [#allocation6], %s25
      %s28 = sshll.u32 [#allocation5], 4
      %s29 = int_to_ptr.vmem [resolvable:$true] %s28
      %31 = dma.hbm_to_vmem [thread:$0]  %s1, 128, %s29, [#allocation6]
    $region9: #{tpu_custom_call.1} parent=1 // pred_fallthru
      _
    // Predicated region
    $region10: #{tpu_custom_call.1} parent=1 // pred_check
      _
    $region11: #{tpu_custom_call.1} parent=1 // pred_check_branch
      %33 = sbr.rel (0) target = $region13
    $region12: #{tpu_custom_call.1} parent=1 // pred_region
      %34 = dma.done [#allocation3], 256
    $region13: #{tpu_custom_call.1} parent=1 // pred_fallthru
      _
    // Predicated region
    $region14: #{tpu_custom_call.1} parent=1 // pred_check
      _
    $region15: #{tpu_custom_call.1} parent=1 // pred_check_branch
      %36 = sbr.rel (0) target = $region17
    $region16: #{tpu_custom_call.1} parent=1 // pred_region
      %37 = dma.done [#allocation6], 128
    $region17: #{tpu_custom_call.1} parent=1 // pred_fallthru
      _
    %v38 = vld [vmem:[#allocation2] sm:$0xff]
    %v39 = vld [vmem:[#allocation2 + $0x8] sm:$0xff]
    %v40 = vld [vmem:[#allocation5] sm:$0xff]
    %v41 = vadd.f32 %v38, %v40
    %v42 = vadd.f32 %v39, %v40
    %vm43 = vcmask 261120
    %44 = vst.msk [vmem:[#allocation7] sm:$0xff] %vm43, %v41
    %45 = vst.msk [vmem:[#allocation7 + $0x8] sm:$0xff] %vm43, %v42
    // Predicated region
    $region18: #{tpu_custom_call.1} parent=1 // pred_check
      _
    $region19: #{tpu_custom_call.1} parent=1 // pred_check_branch
      %47 = sbr.rel (0) target = $region21
    $region20: #{tpu_custom_call.1} parent=1 // pred_region
      %s49 = ssub.s32 256, 256
      %50 = vsyncadd [#allocation4], %s49
      %s51 = sshll.u32 [#allocation7], 4
      %s52 = int_to_ptr.vmem [resolvable:$true] %s51
      %57 = dma.vmem_to_hbm [thread:$0]  %s52, 256, %s2, [#allocation4], 128, 128, 8
    $region21: #{tpu_custom_call.1} parent=1 // pred_fallthru
      _
    // Predicated region
    $region22: #{tpu_custom_call.1} parent=1 // pred_check
      _
    $region23: #{tpu_custom_call.1} parent=1 // pred_check_branch
      %59 = sbr.rel (0) target = $region25
    $region24: #{tpu_custom_call.1} parent=1 // pred_region
      %60 = dma.done [#allocation4], 256
    $region25: #{tpu_custom_call.1} parent=1 // pred_fallthru
      _
    %61 = vsyncpa [#allocation3], 1
    %62 = vsyncpa [#allocation6], 1
    %63 = vsyncpa [#allocation4], 1

</llo_original>
